<compile_context>
chip_gen: v5e
topology: v5e:2x2
jax: 0.10.0
libtpu: 0.0.40
codegen_flags: <defaults>
</compile_context>

<pallas_src>
import functools

import jax
import jax.numpy as jnp
from jax.experimental import pallas as pl
from jax.experimental.pallas import tpu as pltpu


def _flash_attn_kernel(q_ref, kt_ref, v_ref, o_ref, m_ref, l_ref, acc_ref,
                       *, scale, clip):
    # q_ref : (n_head, q_tile, d_head)
    # kt_ref: (n_head, d_head, kv_tile)   (K pre-transposed)
    # v_ref : (n_head, kv_tile, d_head)
    # o_ref : (1, q_tile, n_head * d_head)
    # m_ref / l_ref : (n_head, q_tile, 1) f32 ; acc_ref: (n_head, q_tile, d_head) f32
    n_head, _, d_head = q_ref.shape
    kv_idx = pl.program_id(2)

    @pl.when(kv_idx == 0)
    def _init():
        m_ref[...] = jnp.full_like(m_ref, -jnp.inf)
        l_ref[...] = jnp.zeros_like(l_ref)
        acc_ref[...] = jnp.zeros_like(acc_ref)

    # Static unroll over heads: each head is an independent 2-D flash update.
    for h in range(n_head):
        q = q_ref[h] * scale                    # fold scale into the small q tile
        s = jnp.dot(q, kt_ref[h],               # (q_tile, kv_tile), f32 accum on MXU
                    preferred_element_type=jnp.float32)
        if clip > 0:
            s = clip * jnp.tanh(s)

        m_prev = m_ref[h]                                        # (q_tile, 1)
        m_new = jnp.maximum(m_prev, jnp.max(s, axis=-1, keepdims=True))
        alpha = jnp.exp(m_prev - m_new)
        p = jnp.exp(s - m_new)                                   # (q_tile, kv_tile)
        l_ref[h] = alpha * l_ref[h] + jnp.sum(p, axis=-1, keepdims=True)
        acc_ref[h] = alpha * acc_ref[h] + jnp.dot(
            p.astype(v_ref.dtype), v_ref[h],
            preferred_element_type=jnp.float32)
        m_ref[h] = m_new

    @pl.when(kv_idx == pl.num_programs(2) - 1)
    def _finalize():
        for h in range(n_head):
            inv_l = pl.reciprocal(l_ref[h], approx=True)         # EUP vrcp
            o_ref[0, :, h * d_head:(h + 1) * d_head] = (
                acc_ref[h] * inv_l).astype(o_ref.dtype)


def _pick_tile(n, target, unit):
    """Largest multiple of `unit` that divides n and is <= target, else n (full)."""
    best = None
    t = unit
    cap = min(n, target)
    while t <= cap:
        if n % t == 0:
            best = t
        t += unit
    return best if best is not None else n


def multihead_self_attn(q, k, v, n_head, clip=-1.0):
    """q: (qlen, B, H), k/v: (klen, B, H). Returns (qlen, B, H)."""
    qlen, bsz, d_model = q.shape
    klen = k.shape[0]
    assert d_model % n_head == 0
    d_head = d_model // n_head
    scale = 1.0 / (d_head ** 0.5)

    # One fused reshape+transpose pass per input (head-major layouts):
    #   Q -> (B*n_head, qlen, d_head)
    #   K -> (B*n_head, d_head, klen)   (pre-transposed for the MXU)
    #   V -> (B*n_head, klen, d_head)
    qh = q.reshape(qlen, bsz, n_head, d_head).transpose(1, 2, 0, 3)
    qh = qh.reshape(bsz * n_head, qlen, d_head)
    kt = k.reshape(klen, bsz, n_head, d_head).transpose(1, 2, 3, 0)
    kt = kt.reshape(bsz * n_head, d_head, klen)
    vh = v.reshape(klen, bsz, n_head, d_head).transpose(1, 2, 0, 3)
    vh = vh.reshape(bsz * n_head, klen, d_head)

    # Tile sizes: second-to-last dims must be multiples of 8 (or full), last
    # dims multiples of 128 (or full). Targets sized so double-buffered blocks
    # + f32 accumulator stay well under v7x's 64 MiB VMEM.
    q_tile = _pick_tile(qlen, 256, 8)
    kv_tile = _pick_tile(klen, 512, 128)
    grid = (bsz, qlen // q_tile, klen // kv_tile)

    kernel = functools.partial(_flash_attn_kernel, scale=scale, clip=clip)

    out = pl.pallas_call(
        kernel,
        out_shape=jax.ShapeDtypeStruct((bsz, qlen, d_model), q.dtype),
        grid=grid,
        in_specs=[
            # All heads of batch b per step (rows b*n_head : (b+1)*n_head).
            pl.BlockSpec((n_head, q_tile, d_head), lambda b, qi, kv: (b, qi, 0)),
            pl.BlockSpec((n_head, d_head, kv_tile), lambda b, qi, kv: (b, 0, kv)),
            pl.BlockSpec((n_head, kv_tile, d_head), lambda b, qi, kv: (b, kv, 0)),
        ],
        # Lane-dense output block (last dim = d_model), constant across kv.
        out_specs=pl.BlockSpec((1, q_tile, d_model), lambda b, qi, kv: (b, qi, 0)),
        scratch_shapes=[
            pltpu.VMEM((n_head, q_tile, 1), jnp.float32),       # running max
            pltpu.VMEM((n_head, q_tile, 1), jnp.float32),       # running denom
            pltpu.VMEM((n_head, q_tile, d_head), jnp.float32),  # accumulator
        ],
        compiler_params=pltpu.CompilerParams(
            dimension_semantics=("parallel", "parallel", "arbitrary"),
            vmem_limit_bytes=48 * 1024 * 1024,
        ),
    )(qh, kt, vh)

    # (B, qlen, d_model) -> (qlen, B, d_model)
    return jnp.transpose(out, (1, 0, 2))


def _reference(q, k, v, n_head, clip=-1.0):
    qlen, bsz, H = q.shape
    klen = k.shape[0]
    d_head = H // n_head
    qh = q.reshape(qlen, bsz, n_head, d_head)
    kh = k.reshape(klen, bsz, n_head, d_head)
    vh = v.reshape(klen, bsz, n_head, d_head)
    score = jnp.einsum('ibnd,jbnd->ijbn', qh, kh) * (1.0 / d_head ** 0.5)
    if clip > 0:
        score = clip * jnp.tanh(score)
    weight = jax.nn.softmax(score, axis=1)
    out = jnp.einsum('ijbn,jbnd->ibnd', weight, vh)
    return out.reshape(qlen, bsz, H)


if __name__ == "__main__":
    # Small shapes: n_head=4, d_model=32 (d_head=8), batch=2, qlen=8, klen=16
    n_head, d_model = 4, 32
    qlen, klen, bsz = 8, 16, 2

    key = jax.random.PRNGKey(0)
    kq, kk, kv = jax.random.split(key, 3)
    q = jax.random.normal(kq, (qlen, bsz, d_model), dtype=jnp.float32)
    k = jax.random.normal(kk, (klen, bsz, d_model), dtype=jnp.float32)
    v = jax.random.normal(kv, (klen, bsz, d_model), dtype=jnp.float32)

    # Tolerance is loosened vs a pure-f32 reference because the softmax
    # normalization uses the hardware approximate reciprocal (EUP vrcp).
    for clip in (-1.0, 0.5):
        out = jax.block_until_ready(multihead_self_attn(q, k, v, n_head, clip=clip))
        ref = _reference(q, k, v, n_head, clip=clip)
        assert out.shape == (qlen, bsz, d_model)
        assert jnp.allclose(out, ref, atol=1e-2, rtol=1e-2), (
            clip, float(jnp.max(jnp.abs(out - ref))))

    print("KERNEL_OK")
</pallas_src>

<mosaic_0001>
module attributes {stable_mosaic.version = 11 : i64} {
  func.func @_flash_attn_kernel(%arg0: i32, %arg1: i32, %arg2: i32, %arg3: memref<4x8x8xf32, #tpu.memory_space<vmem>>, %arg4: memref<4x8x16xf32, #tpu.memory_space<vmem>>, %arg5: memref<4x16x8xf32, #tpu.memory_space<vmem>>, %arg6: memref<1x8x32xf32, #tpu.memory_space<vmem>>, %arg7: memref<4x8x1xf32, #tpu.memory_space<vmem>>, %arg8: memref<4x8x1xf32, #tpu.memory_space<vmem>>, %arg9: memref<4x8x8xf32, #tpu.memory_space<vmem>>) attributes {dimension_semantics = [#tpu.dimension_semantics<parallel>, #tpu.dimension_semantics<parallel>, #tpu.dimension_semantics<arbitrary>], iteration_bounds = array<i64: 2, 1, 1>, scalar_prefetch = 0 : i64, scratch_operands = 3 : i64, tpu.core_type = #tpu.core_type<tc>, window_params = [{transform_indices = @transform_0, window_bounds = array<i64: 4, 8, 8>}, {transform_indices = @transform_1, window_bounds = array<i64: 4, 8, 16>}, {transform_indices = @transform_2, window_bounds = array<i64: 4, 16, 8>}, {transform_indices = @transform_3, window_bounds = array<i64: 1, 8, 32>}]} {
    %c0_i32 = arith.constant 0 : i32
    %0 = arith.cmpi eq, %arg2, %c0_i32 : i32
    %1 = arith.extui %0 : i1 to i32
    %c0_i32_0 = arith.constant 0 : i32
    %2 = arith.cmpi ne, %1, %c0_i32_0 : i32
    scf.if %2 {
      %cst_126 = arith.constant 0xFF800000 : f32
      %166 = vector.broadcast %cst_126 : f32 to vector<4x8x1xf32>
      %c0_127 = arith.constant 0 : index
      %c0_128 = arith.constant 0 : index
      %c0_129 = arith.constant 0 : index
      %167 = vector.load %arg7[%c0_127, %c0_128, %c0_129] : memref<4x8x1xf32, #tpu.memory_space<vmem>>, vector<4x8x1xf32>
      tpu.vector_store %arg7[%c0_127, %c0_128, %c0_129], %166 {strides = array<i32>} : memref<4x8x1xf32, #tpu.memory_space<vmem>>, vector<4x8x1xf32>,
      %cst_130 = arith.constant 0.000000e+00 : f32
      %168 = vector.broadcast %cst_130 : f32 to vector<4x8x1xf32>
      %c0_131 = arith.constant 0 : index
      %c0_132 = arith.constant 0 : index
      %c0_133 = arith.constant 0 : index
      %169 = vector.load %arg8[%c0_131, %c0_132, %c0_133] : memref<4x8x1xf32, #tpu.memory_space<vmem>>, vector<4x8x1xf32>
      tpu.vector_store %arg8[%c0_131, %c0_132, %c0_133], %168 {strides = array<i32>} : memref<4x8x1xf32, #tpu.memory_space<vmem>>, vector<4x8x1xf32>,
      %cst_134 = arith.constant 0.000000e+00 : f32
      %170 = vector.broadcast %cst_134 : f32 to vector<4x8x8xf32>
      %c0_135 = arith.constant 0 : index
      %c0_136 = arith.constant 0 : index
      %c0_137 = arith.constant 0 : index
      %171 = vector.load %arg9[%c0_135, %c0_136, %c0_137] : memref<4x8x8xf32, #tpu.memory_space<vmem>>, vector<4x8x8xf32>
      tpu.vector_store %arg9[%c0_135, %c0_136, %c0_137], %170 {strides = array<i32>} : memref<4x8x8xf32, #tpu.memory_space<vmem>>, vector<4x8x8xf32>,
    } else {
    }
    %c0 = arith.constant 0 : index
    %c0_1 = arith.constant 0 : index
    %c0_2 = arith.constant 0 : index
    %3 = vector.load %arg3[%c0, %c0_1, %c0_2] : memref<4x8x8xf32, #tpu.memory_space<vmem>>, vector<1x8x8xf32>
    %4 = vector.shape_cast %3 : vector<1x8x8xf32> to vector<8x8xf32>
    %cst = arith.constant 0.353553385 : f32
    %5 = vector.broadcast %cst : f32 to vector<8x8xf32>
    %6 = arith.mulf %4, %5 : vector<8x8xf32>
    %c0_3 = arith.constant 0 : index
    %c0_4 = arith.constant 0 : index
    %c0_5 = arith.constant 0 : index
    %7 = vector.load %arg4[%c0_3, %c0_4, %c0_5] : memref<4x8x16xf32, #tpu.memory_space<vmem>>, vector<1x8x16xf32>
    %8 = vector.shape_cast %7 : vector<1x8x16xf32> to vector<8x16xf32>
    %cst_6 = arith.constant dense<0.000000e+00> : vector<8x16xf32>
    %9 = tpu.matmul %6, %8, %cst_6 {dimension_numbers = #tpu.dot_dimension_numbers<[1], [0], [0], [1], [0, 0, 1, 1], [], []>} : vector<8x8xf32>, vector<8x16xf32>, vector<8x16xf32> -> vector<8x16xf32>
    %c0_7 = arith.constant 0 : index
    %c0_8 = arith.constant 0 : index
    %c0_9 = arith.constant 0 : index
    %10 = vector.load %arg7[%c0_7, %c0_8, %c0_9] : memref<4x8x1xf32, #tpu.memory_space<vmem>>, vector<1x8x1xf32>
    %11 = vector.shape_cast %10 : vector<1x8x1xf32> to vector<8x1xf32>
    %cst_10 = arith.constant dense<0xFF800000> : vector<8xf32>
    %12 = vector.multi_reduction <maximumf>, %9, %cst_10 [1] : vector<8x16xf32> to vector<8xf32>
    %13 = vector.shape_cast %12 : vector<8xf32> to vector<8x1xf32>
    %14 = arith.maximumf %11, %13 : vector<8x1xf32>
    %15 = arith.subf %11, %14 : vector<8x1xf32>
    %16 = math.exp %15 : vector<8x1xf32>
    %17 = vector.broadcast %14 : vector<8x1xf32> to vector<8x16xf32>
    %18 = arith.subf %9, %17 : vector<8x16xf32>
    %19 = math.exp %18 : vector<8x16xf32>
    %c0_11 = arith.constant 0 : index
    %c0_12 = arith.constant 0 : index
    %c0_13 = arith.constant 0 : index
    %20 = vector.load %arg8[%c0_11, %c0_12, %c0_13] : memref<4x8x1xf32, #tpu.memory_space<vmem>>, vector<1x8x1xf32>
    %21 = vector.shape_cast %20 : vector<1x8x1xf32> to vector<8x1xf32>
    %22 = arith.mulf %16, %21 : vector<8x1xf32>
    %cst_14 = arith.constant dense<0.000000e+00> : vector<8xf32>
    %23 = vector.multi_reduction <add>, %19, %cst_14 [1] : vector<8x16xf32> to vector<8xf32>
    %24 = vector.shape_cast %23 : vector<8xf32> to vector<8x1xf32>
    %25 = arith.addf %22, %24 : vector<8x1xf32>
    %c0_15 = arith.constant 0 : index
    %c0_16 = arith.constant 0 : index
    %c0_17 = arith.constant 0 : index
    %26 = vector.load %arg8[%c0_15, %c0_16, %c0_17] : memref<4x8x1xf32, #tpu.memory_space<vmem>>, vector<1x8x1xf32>
    %27 = vector.shape_cast %26 : vector<1x8x1xf32> to vector<8x1xf32>
    %28 = vector.shape_cast %25 : vector<8x1xf32> to vector<1x8x1xf32>
    tpu.vector_store %arg8[%c0_15, %c0_16, %c0_17], %28 {strides = array<i32>} : memref<4x8x1xf32, #tpu.memory_space<vmem>>, vector<1x8x1xf32>,
    %c0_18 = arith.constant 0 : index
    %c0_19 = arith.constant 0 : index
    %c0_20 = arith.constant 0 : index
    %29 = vector.load %arg9[%c0_18, %c0_19, %c0_20] : memref<4x8x8xf32, #tpu.memory_space<vmem>>, vector<1x8x8xf32>
    %30 = vector.shape_cast %29 : vector<1x8x8xf32> to vector<8x8xf32>
    %31 = vector.broadcast %16 : vector<8x1xf32> to vector<8x8xf32>
    %32 = arith.mulf %31, %30 : vector<8x8xf32>
    %c0_21 = arith.constant 0 : index
    %c0_22 = arith.constant 0 : index
    %c0_23 = arith.constant 0 : index
    %33 = vector.load %arg5[%c0_21, %c0_22, %c0_23] : memref<4x16x8xf32, #tpu.memory_space<vmem>>, vector<1x16x8xf32>
    %34 = vector.shape_cast %33 : vector<1x16x8xf32> to vector<16x8xf32>
    %cst_24 = arith.constant dense<0.000000e+00> : vector<8x8xf32>
    %35 = tpu.matmul %19, %34, %cst_24 {dimension_numbers = #tpu.dot_dimension_numbers<[1], [0], [0], [1], [0, 0, 1, 1], [], []>} : vector<8x16xf32>, vector<16x8xf32>, vector<8x8xf32> -> vector<8x8xf32>
    %36 = arith.addf %32, %35 : vector<8x8xf32>
    %c0_25 = arith.constant 0 : index
    %c0_26 = arith.constant 0 : index
    %c0_27 = arith.constant 0 : index
    %37 = vector.load %arg9[%c0_25, %c0_26, %c0_27] : memref<4x8x8xf32, #tpu.memory_space<vmem>>, vector<1x8x8xf32>
    %38 = vector.shape_cast %37 : vector<1x8x8xf32> to vector<8x8xf32>
    %39 = vector.shape_cast %36 : vector<8x8xf32> to vector<1x8x8xf32>
    tpu.vector_store %arg9[%c0_25, %c0_26, %c0_27], %39 {strides = array<i32>} : memref<4x8x8xf32, #tpu.memory_space<vmem>>, vector<1x8x8xf32>,
    %c0_28 = arith.constant 0 : index
    %c0_29 = arith.constant 0 : index
    %c0_30 = arith.constant 0 : index
    %40 = vector.load %arg7[%c0_28, %c0_29, %c0_30] : memref<4x8x1xf32, #tpu.memory_space<vmem>>, vector<1x8x1xf32>
    %41 = vector.shape_cast %40 : vector<1x8x1xf32> to vector<8x1xf32>
    %42 = vector.shape_cast %14 : vector<8x1xf32> to vector<1x8x1xf32>
    tpu.vector_store %arg7[%c0_28, %c0_29, %c0_30], %42 {strides = array<i32>} : memref<4x8x1xf32, #tpu.memory_space<vmem>>, vector<1x8x1xf32>,
    %c1 = arith.constant 1 : index
    %c0_31 = arith.constant 0 : index
    %c0_32 = arith.constant 0 : index
    %43 = vector.load %arg3[%c1, %c0_31, %c0_32] : memref<4x8x8xf32, #tpu.memory_space<vmem>>, vector<1x8x8xf32>
    %44 = vector.shape_cast %43 : vector<1x8x8xf32> to vector<8x8xf32>
    %cst_33 = arith.constant 0.353553385 : f32
    %45 = vector.broadcast %cst_33 : f32 to vector<8x8xf32>
    %46 = arith.mulf %44, %45 : vector<8x8xf32>
    %c1_34 = arith.constant 1 : index
    %c0_35 = arith.constant 0 : index
    %c0_36 = arith.constant 0 : index
    %47 = vector.load %arg4[%c1_34, %c0_35, %c0_36] : memref<4x8x16xf32, #tpu.memory_space<vmem>>, vector<1x8x16xf32>
    %48 = vector.shape_cast %47 : vector<1x8x16xf32> to vector<8x16xf32>
    %cst_37 = arith.constant dense<0.000000e+00> : vector<8x16xf32>
    %49 = tpu.matmul %46, %48, %cst_37 {dimension_numbers = #tpu.dot_dimension_numbers<[1], [0], [0], [1], [0, 0, 1, 1], [], []>} : vector<8x8xf32>, vector<8x16xf32>, vector<8x16xf32> -> vector<8x16xf32>
    %c1_38 = arith.constant 1 : index
    %c0_39 = arith.constant 0 : index
    %c0_40 = arith.constant 0 : index
    %50 = vector.load %arg7[%c1_38, %c0_39, %c0_40] : memref<4x8x1xf32, #tpu.memory_space<vmem>>, vector<1x8x1xf32>
    %51 = vector.shape_cast %50 : vector<1x8x1xf32> to vector<8x1xf32>
    %cst_41 = arith.constant dense<0xFF800000> : vector<8xf32>
    %52 = vector.multi_reduction <maximumf>, %49, %cst_41 [1] : vector<8x16xf32> to vector<8xf32>
    %53 = vector.shape_cast %52 : vector<8xf32> to vector<8x1xf32>
    %54 = arith.maximumf %51, %53 : vector<8x1xf32>
    %55 = arith.subf %51, %54 : vector<8x1xf32>
    %56 = math.exp %55 : vector<8x1xf32>
    %57 = vector.broadcast %54 : vector<8x1xf32> to vector<8x16xf32>
    %58 = arith.subf %49, %57 : vector<8x16xf32>
    %59 = math.exp %58 : vector<8x16xf32>
    %c1_42 = arith.constant 1 : index
    %c0_43 = arith.constant 0 : index
    %c0_44 = arith.constant 0 : index
    %60 = vector.load %arg8[%c1_42, %c0_43, %c0_44] : memref<4x8x1xf32, #tpu.memory_space<vmem>>, vector<1x8x1xf32>
    %61 = vector.shape_cast %60 : vector<1x8x1xf32> to vector<8x1xf32>
    %62 = arith.mulf %56, %61 : vector<8x1xf32>
    %cst_45 = arith.constant dense<0.000000e+00> : vector<8xf32>
    %63 = vector.multi_reduction <add>, %59, %cst_45 [1] : vector<8x16xf32> to vector<8xf32>
    %64 = vector.shape_cast %63 : vector<8xf32> to vector<8x1xf32>
    %65 = arith.addf %62, %64 : vector<8x1xf32>
    %c1_46 = arith.constant 1 : index
    %c0_47 = arith.constant 0 : index
    %c0_48 = arith.constant 0 : index
    %66 = vector.load %arg8[%c1_46, %c0_47, %c0_48] : memref<4x8x1xf32, #tpu.memory_space<vmem>>, vector<1x8x1xf32>
    %67 = vector.shape_cast %66 : vector<1x8x1xf32> to vector<8x1xf32>
    %68 = vector.shape_cast %65 : vector<8x1xf32> to vector<1x8x1xf32>
    tpu.vector_store %arg8[%c1_46, %c0_47, %c0_48], %68 {strides = array<i32>} : memref<4x8x1xf32, #tpu.memory_space<vmem>>, vector<1x8x1xf32>,
    %c1_49 = arith.constant 1 : index
    %c0_50 = arith.constant 0 : index
    %c0_51 = arith.constant 0 : index
    %69 = vector.load %arg9[%c1_49, %c0_50, %c0_51] : memref<4x8x8xf32, #tpu.memory_space<vmem>>, vector<1x8x8xf32>
    %70 = vector.shape_cast %69 : vector<1x8x8xf32> to vector<8x8xf32>
    %71 = vector.broadcast %56 : vector<8x1xf32> to vector<8x8xf32>
    %72 = arith.mulf %71, %70 : vector<8x8xf32>
    %c1_52 = arith.constant 1 : index
    %c0_53 = arith.constant 0 : index
    %c0_54 = arith.constant 0 : index
    %73 = vector.load %arg5[%c1_52, %c0_53, %c0_54] : memref<4x16x8xf32, #tpu.memory_space<vmem>>, vector<1x16x8xf32>
    %74 = vector.shape_cast %73 : vector<1x16x8xf32> to vector<16x8xf32>
    %cst_55 = arith.constant dense<0.000000e+00> : vector<8x8xf32>
    %75 = tpu.matmul %59, %74, %cst_55 {dimension_numbers = #tpu.dot_dimension_numbers<[1], [0], [0], [1], [0, 0, 1, 1], [], []>} : vector<8x16xf32>, vector<16x8xf32>, vector<8x8xf32> -> vector<8x8xf32>
    %76 = arith.addf %72, %75 : vector<8x8xf32>
    %c1_56 = arith.constant 1 : index
    %c0_57 = arith.constant 0 : index
    %c0_58 = arith.constant 0 : index
    %77 = vector.load %arg9[%c1_56, %c0_57, %c0_58] : memref<4x8x8xf32, #tpu.memory_space<vmem>>, vector<1x8x8xf32>
    %78 = vector.shape_cast %77 : vector<1x8x8xf32> to vector<8x8xf32>
    %79 = vector.shape_cast %76 : vector<8x8xf32> to vector<1x8x8xf32>
    tpu.vector_store %arg9[%c1_56, %c0_57, %c0_58], %79 {strides = array<i32>} : memref<4x8x8xf32, #tpu.memory_space<vmem>>, vector<1x8x8xf32>,
    %c1_59 = arith.constant 1 : index
    %c0_60 = arith.constant 0 : index
    %c0_61 = arith.constant 0 : index
    %80 = vector.load %arg7[%c1_59, %c0_60, %c0_61] : memref<4x8x1xf32, #tpu.memory_space<vmem>>, vector<1x8x1xf32>
    %81 = vector.shape_cast %80 : vector<1x8x1xf32> to vector<8x1xf32>
    %82 = vector.shape_cast %54 : vector<8x1xf32> to vector<1x8x1xf32>
    tpu.vector_store %arg7[%c1_59, %c0_60, %c0_61], %82 {strides = array<i32>} : memref<4x8x1xf32, #tpu.memory_space<vmem>>, vector<1x8x1xf32>,
    %c2 = arith.constant 2 : index
    %c0_62 = arith.constant 0 : index
    %c0_63 = arith.constant 0 : index
    %83 = vector.load %arg3[%c2, %c0_62, %c0_63] : memref<4x8x8xf32, #tpu.memory_space<vmem>>, vector<1x8x8xf32>
    %84 = vector.shape_cast %83 : vector<1x8x8xf32> to vector<8x8xf32>
    %cst_64 = arith.constant 0.353553385 : f32
    %85 = vector.broadcast %cst_64 : f32 to vector<8x8xf32>
    %86 = arith.mulf %84, %85 : vector<8x8xf32>
    %c2_65 = arith.constant 2 : index
    %c0_66 = arith.constant 0 : index
    %c0_67 = arith.constant 0 : index
    %87 = vector.load %arg4[%c2_65, %c0_66, %c0_67] : memref<4x8x16xf32, #tpu.memory_space<vmem>>, vector<1x8x16xf32>
    %88 = vector.shape_cast %87 : vector<1x8x16xf32> to vector<8x16xf32>
    %cst_68 = arith.constant dense<0.000000e+00> : vector<8x16xf32>
    %89 = tpu.matmul %86, %88, %cst_68 {dimension_numbers = #tpu.dot_dimension_numbers<[1], [0], [0], [1], [0, 0, 1, 1], [], []>} : vector<8x8xf32>, vector<8x16xf32>, vector<8x16xf32> -> vector<8x16xf32>
    %c2_69 = arith.constant 2 : index
    %c0_70 = arith.constant 0 : index
    %c0_71 = arith.constant 0 : index
    %90 = vector.load %arg7[%c2_69, %c0_70, %c0_71] : memref<4x8x1xf32, #tpu.memory_space<vmem>>, vector<1x8x1xf32>
    %91 = vector.shape_cast %90 : vector<1x8x1xf32> to vector<8x1xf32>
    %cst_72 = arith.constant dense<0xFF800000> : vector<8xf32>
    %92 = vector.multi_reduction <maximumf>, %89, %cst_72 [1] : vector<8x16xf32> to vector<8xf32>
    %93 = vector.shape_cast %92 : vector<8xf32> to vector<8x1xf32>
    %94 = arith.maximumf %91, %93 : vector<8x1xf32>
    %95 = arith.subf %91, %94 : vector<8x1xf32>
    %96 = math.exp %95 : vector<8x1xf32>
    %97 = vector.broadcast %94 : vector<8x1xf32> to vector<8x16xf32>
    %98 = arith.subf %89, %97 : vector<8x16xf32>
    %99 = math.exp %98 : vector<8x16xf32>
    %c2_73 = arith.constant 2 : index
    %c0_74 = arith.constant 0 : index
    %c0_75 = arith.constant 0 : index
    %100 = vector.load %arg8[%c2_73, %c0_74, %c0_75] : memref<4x8x1xf32, #tpu.memory_space<vmem>>, vector<1x8x1xf32>
    %101 = vector.shape_cast %100 : vector<1x8x1xf32> to vector<8x1xf32>
    %102 = arith.mulf %96, %101 : vector<8x1xf32>
    %cst_76 = arith.constant dense<0.000000e+00> : vector<8xf32>
    %103 = vector.multi_reduction <add>, %99, %cst_76 [1] : vector<8x16xf32> to vector<8xf32>
    %104 = vector.shape_cast %103 : vector<8xf32> to vector<8x1xf32>
    %105 = arith.addf %102, %104 : vector<8x1xf32>
    %c2_77 = arith.constant 2 : index
    %c0_78 = arith.constant 0 : index
    %c0_79 = arith.constant 0 : index
    %106 = vector.load %arg8[%c2_77, %c0_78, %c0_79] : memref<4x8x1xf32, #tpu.memory_space<vmem>>, vector<1x8x1xf32>
    %107 = vector.shape_cast %106 : vector<1x8x1xf32> to vector<8x1xf32>
    %108 = vector.shape_cast %105 : vector<8x1xf32> to vector<1x8x1xf32>
    tpu.vector_store %arg8[%c2_77, %c0_78, %c0_79], %108 {strides = array<i32>} : memref<4x8x1xf32, #tpu.memory_space<vmem>>, vector<1x8x1xf32>,
    %c2_80 = arith.constant 2 : index
    %c0_81 = arith.constant 0 : index
    %c0_82 = arith.constant 0 : index
    %109 = vector.load %arg9[%c2_80, %c0_81, %c0_82] : memref<4x8x8xf32, #tpu.memory_space<vmem>>, vector<1x8x8xf32>
    %110 = vector.shape_cast %109 : vector<1x8x8xf32> to vector<8x8xf32>
    %111 = vector.broadcast %96 : vector<8x1xf32> to vector<8x8xf32>
    %112 = arith.mulf %111, %110 : vector<8x8xf32>
    %c2_83 = arith.constant 2 : index
    %c0_84 = arith.constant 0 : index
    %c0_85 = arith.constant 0 : index
    %113 = vector.load %arg5[%c2_83, %c0_84, %c0_85] : memref<4x16x8xf32, #tpu.memory_space<vmem>>, vector<1x16x8xf32>
    %114 = vector.shape_cast %113 : vector<1x16x8xf32> to vector<16x8xf32>
    %cst_86 = arith.constant dense<0.000000e+00> : vector<8x8xf32>
    %115 = tpu.matmul %99, %114, %cst_86 {dimension_numbers = #tpu.dot_dimension_numbers<[1], [0], [0], [1], [0, 0, 1, 1], [], []>} : vector<8x16xf32>, vector<16x8xf32>, vector<8x8xf32> -> vector<8x8xf32>
    %116 = arith.addf %112, %115 : vector<8x8xf32>
    %c2_87 = arith.constant 2 : index
    %c0_88 = arith.constant 0 : index
    %c0_89 = arith.constant 0 : index
    %117 = vector.load %arg9[%c2_87, %c0_88, %c0_89] : memref<4x8x8xf32, #tpu.memory_space<vmem>>, vector<1x8x8xf32>
    %118 = vector.shape_cast %117 : vector<1x8x8xf32> to vector<8x8xf32>
    %119 = vector.shape_cast %116 : vector<8x8xf32> to vector<1x8x8xf32>
    tpu.vector_store %arg9[%c2_87, %c0_88, %c0_89], %119 {strides = array<i32>} : memref<4x8x8xf32, #tpu.memory_space<vmem>>, vector<1x8x8xf32>,
    %c2_90 = arith.constant 2 : index
    %c0_91 = arith.constant 0 : index
    %c0_92 = arith.constant 0 : index
    %120 = vector.load %arg7[%c2_90, %c0_91, %c0_92] : memref<4x8x1xf32, #tpu.memory_space<vmem>>, vector<1x8x1xf32>
    %121 = vector.shape_cast %120 : vector<1x8x1xf32> to vector<8x1xf32>
    %122 = vector.shape_cast %94 : vector<8x1xf32> to vector<1x8x1xf32>
    tpu.vector_store %arg7[%c2_90, %c0_91, %c0_92], %122 {strides = array<i32>} : memref<4x8x1xf32, #tpu.memory_space<vmem>>, vector<1x8x1xf32>,
    %c3 = arith.constant 3 : index
    %c0_93 = arith.constant 0 : index
    %c0_94 = arith.constant 0 : index
    %123 = vector.load %arg3[%c3, %c0_93, %c0_94] : memref<4x8x8xf32, #tpu.memory_space<vmem>>, vector<1x8x8xf32>
    %124 = vector.shape_cast %123 : vector<1x8x8xf32> to vector<8x8xf32>
    %cst_95 = arith.constant 0.353553385 : f32
    %125 = vector.broadcast %cst_95 : f32 to vector<8x8xf32>
    %126 = arith.mulf %124, %125 : vector<8x8xf32>
    %c3_96 = arith.constant 3 : index
    %c0_97 = arith.constant 0 : index
    %c0_98 = arith.constant 0 : index
    %127 = vector.load %arg4[%c3_96, %c0_97, %c0_98] : memref<4x8x16xf32, #tpu.memory_space<vmem>>, vector<1x8x16xf32>
    %128 = vector.shape_cast %127 : vector<1x8x16xf32> to vector<8x16xf32>
    %cst_99 = arith.constant dense<0.000000e+00> : vector<8x16xf32>
    %129 = tpu.matmul %126, %128, %cst_99 {dimension_numbers = #tpu.dot_dimension_numbers<[1], [0], [0], [1], [0, 0, 1, 1], [], []>} : vector<8x8xf32>, vector<8x16xf32>, vector<8x16xf32> -> vector<8x16xf32>
    %c3_100 = arith.constant 3 : index
    %c0_101 = arith.constant 0 : index
    %c0_102 = arith.constant 0 : index
    %130 = vector.load %arg7[%c3_100, %c0_101, %c0_102] : memref<4x8x1xf32, #tpu.memory_space<vmem>>, vector<1x8x1xf32>
    %131 = vector.shape_cast %130 : vector<1x8x1xf32> to vector<8x1xf32>
    %cst_103 = arith.constant dense<0xFF800000> : vector<8xf32>
    %132 = vector.multi_reduction <maximumf>, %129, %cst_103 [1] : vector<8x16xf32> to vector<8xf32>
    %133 = vector.shape_cast %132 : vector<8xf32> to vector<8x1xf32>
    %134 = arith.maximumf %131, %133 : vector<8x1xf32>
    %135 = arith.subf %131, %134 : vector<8x1xf32>
    %136 = math.exp %135 : vector<8x1xf32>
    %137 = vector.broadcast %134 : vector<8x1xf32> to vector<8x16xf32>
    %138 = arith.subf %129, %137 : vector<8x16xf32>
    %139 = math.exp %138 : vector<8x16xf32>
    %c3_104 = arith.constant 3 : index
    %c0_105 = arith.constant 0 : index
    %c0_106 = arith.constant 0 : index
    %140 = vector.load %arg8[%c3_104, %c0_105, %c0_106] : memref<4x8x1xf32, #tpu.memory_space<vmem>>, vector<1x8x1xf32>
    %141 = vector.shape_cast %140 : vector<1x8x1xf32> to vector<8x1xf32>
    %142 = arith.mulf %136, %141 : vector<8x1xf32>
    %cst_107 = arith.constant dense<0.000000e+00> : vector<8xf32>
    %143 = vector.multi_reduction <add>, %139, %cst_107 [1] : vector<8x16xf32> to vector<8xf32>
    %144 = vector.shape_cast %143 : vector<8xf32> to vector<8x1xf32>
    %145 = arith.addf %142, %144 : vector<8x1xf32>
    %c3_108 = arith.constant 3 : index
    %c0_109 = arith.constant 0 : index
    %c0_110 = arith.constant 0 : index
    %146 = vector.load %arg8[%c3_108, %c0_109, %c0_110] : memref<4x8x1xf32, #tpu.memory_space<vmem>>, vector<1x8x1xf32>
    %147 = vector.shape_cast %146 : vector<1x8x1xf32> to vector<8x1xf32>
    %148 = vector.shape_cast %145 : vector<8x1xf32> to vector<1x8x1xf32>
    tpu.vector_store %arg8[%c3_108, %c0_109, %c0_110], %148 {strides = array<i32>} : memref<4x8x1xf32, #tpu.memory_space<vmem>>, vector<1x8x1xf32>,
    %c3_111 = arith.constant 3 : index
    %c0_112 = arith.constant 0 : index
    %c0_113 = arith.constant 0 : index
    %149 = vector.load %arg9[%c3_111, %c0_112, %c0_113] : memref<4x8x8xf32, #tpu.memory_space<vmem>>, vector<1x8x8xf32>
    %150 = vector.shape_cast %149 : vector<1x8x8xf32> to vector<8x8xf32>
    %151 = vector.broadcast %136 : vector<8x1xf32> to vector<8x8xf32>
    %152 = arith.mulf %151, %150 : vector<8x8xf32>
    %c3_114 = arith.constant 3 : index
    %c0_115 = arith.constant 0 : index
    %c0_116 = arith.constant 0 : index
    %153 = vector.load %arg5[%c3_114, %c0_115, %c0_116] : memref<4x16x8xf32, #tpu.memory_space<vmem>>, vector<1x16x8xf32>
    %154 = vector.shape_cast %153 : vector<1x16x8xf32> to vector<16x8xf32>
    %cst_117 = arith.constant dense<0.000000e+00> : vector<8x8xf32>
    %155 = tpu.matmul %139, %154, %cst_117 {dimension_numbers = #tpu.dot_dimension_numbers<[1], [0], [0], [1], [0, 0, 1, 1], [], []>} : vector<8x16xf32>, vector<16x8xf32>, vector<8x8xf32> -> vector<8x8xf32>
    %156 = arith.addf %152, %155 : vector<8x8xf32>
    %c3_118 = arith.constant 3 : index
    %c0_119 = arith.constant 0 : index
    %c0_120 = arith.constant 0 : index
    %157 = vector.load %arg9[%c3_118, %c0_119, %c0_120] : memref<4x8x8xf32, #tpu.memory_space<vmem>>, vector<1x8x8xf32>
    %158 = vector.shape_cast %157 : vector<1x8x8xf32> to vector<8x8xf32>
    %159 = vector.shape_cast %156 : vector<8x8xf32> to vector<1x8x8xf32>
    tpu.vector_store %arg9[%c3_118, %c0_119, %c0_120], %159 {strides = array<i32>} : memref<4x8x8xf32, #tpu.memory_space<vmem>>, vector<1x8x8xf32>,
    %c3_121 = arith.constant 3 : index
    %c0_122 = arith.constant 0 : index
    %c0_123 = arith.constant 0 : index
    %160 = vector.load %arg7[%c3_121, %c0_122, %c0_123] : memref<4x8x1xf32, #tpu.memory_space<vmem>>, vector<1x8x1xf32>
    %161 = vector.shape_cast %160 : vector<1x8x1xf32> to vector<8x1xf32>
    %162 = vector.shape_cast %134 : vector<8x1xf32> to vector<1x8x1xf32>
    tpu.vector_store %arg7[%c3_121, %c0_122, %c0_123], %162 {strides = array<i32>} : memref<4x8x1xf32, #tpu.memory_space<vmem>>, vector<1x8x1xf32>,
    %c0_i32_124 = arith.constant 0 : i32
    %163 = arith.cmpi eq, %arg2, %c0_i32_124 : i32
    %164 = arith.extui %163 : i1 to i32
    %c0_i32_125 = arith.constant 0 : i32
    %165 = arith.cmpi ne, %164, %c0_i32_125 : i32
    scf.if %165 {
      %c0_126 = arith.constant 0 : index
      %c0_127 = arith.constant 0 : index
      %c0_128 = arith.constant 0 : index
      %166 = vector.load %arg8[%c0_126, %c0_127, %c0_128] : memref<4x8x1xf32, #tpu.memory_space<vmem>>, vector<1x8x1xf32>
      %167 = vector.shape_cast %166 : vector<1x8x1xf32> to vector<8x1xf32>
      %168 = tpu.reciprocal %167 {approx = true} : vector<8x1xf32> -> vector<8x1xf32>
      %c0_129 = arith.constant 0 : index
      %c0_130 = arith.constant 0 : index
      %c0_131 = arith.constant 0 : index
      %169 = vector.load %arg9[%c0_129, %c0_130, %c0_131] : memref<4x8x8xf32, #tpu.memory_space<vmem>>, vector<1x8x8xf32>
      %170 = vector.shape_cast %169 : vector<1x8x8xf32> to vector<8x8xf32>
      %171 = vector.broadcast %168 : vector<8x1xf32> to vector<8x8xf32>
      %172 = arith.mulf %170, %171 : vector<8x8xf32>
      %c0_132 = arith.constant 0 : index
      %c0_133 = arith.constant 0 : index
      %c0_134 = arith.constant 0 : index
      %173 = vector.load %arg6[%c0_132, %c0_133, %c0_134] : memref<1x8x32xf32, #tpu.memory_space<vmem>>, vector<1x8x8xf32>
      %174 = vector.shape_cast %173 : vector<1x8x8xf32> to vector<8x8xf32>
      %175 = vector.shape_cast %172 : vector<8x8xf32> to vector<1x8x8xf32>
      tpu.vector_store %arg6[%c0_132, %c0_133, %c0_134], %175 {strides = array<i32>} : memref<1x8x32xf32, #tpu.memory_space<vmem>>, vector<1x8x8xf32>,
      %c1_135 = arith.constant 1 : index
      %c0_136 = arith.constant 0 : index
      %c0_137 = arith.constant 0 : index
      %176 = vector.load %arg8[%c1_135, %c0_136, %c0_137] : memref<4x8x1xf32, #tpu.memory_space<vmem>>, vector<1x8x1xf32>
      %177 = vector.shape_cast %176 : vector<1x8x1xf32> to vector<8x1xf32>
      %178 = tpu.reciprocal %177 {approx = true} : vector<8x1xf32> -> vector<8x1xf32>
      %c1_138 = arith.constant 1 : index
      %c0_139 = arith.constant 0 : index
      %c0_140 = arith.constant 0 : index
      %179 = vector.load %arg9[%c1_138, %c0_139, %c0_140] : memref<4x8x8xf32, #tpu.memory_space<vmem>>, vector<1x8x8xf32>
      %180 = vector.shape_cast %179 : vector<1x8x8xf32> to vector<8x8xf32>
      %181 = vector.broadcast %178 : vector<8x1xf32> to vector<8x8xf32>
      %182 = arith.mulf %180, %181 : vector<8x8xf32>
      %c0_141 = arith.constant 0 : index
      %c0_142 = arith.constant 0 : index
      %c8 = arith.constant 8 : index
      %183 = vector.load %arg6[%c0_141, %c0_142, %c8] : memref<1x8x32xf32, #tpu.memory_space<vmem>>, vector<1x8x8xf32>
      %184 = vector.shape_cast %183 : vector<1x8x8xf32> to vector<8x8xf32>
      %185 = vector.shape_cast %182 : vector<8x8xf32> to vector<1x8x8xf32>
      tpu.vector_store %arg6[%c0_141, %c0_142, %c8], %185 {strides = array<i32>} : memref<1x8x32xf32, #tpu.memory_space<vmem>>, vector<1x8x8xf32>,
      %c2_143 = arith.constant 2 : index
      %c0_144 = arith.constant 0 : index
      %c0_145 = arith.constant 0 : index
      %186 = vector.load %arg8[%c2_143, %c0_144, %c0_145] : memref<4x8x1xf32, #tpu.memory_space<vmem>>, vector<1x8x1xf32>
      %187 = vector.shape_cast %186 : vector<1x8x1xf32> to vector<8x1xf32>
      %188 = tpu.reciprocal %187 {approx = true} : vector<8x1xf32> -> vector<8x1xf32>
      %c2_146 = arith.constant 2 : index
      %c0_147 = arith.constant 0 : index
      %c0_148 = arith.constant 0 : index
      %189 = vector.load %arg9[%c2_146, %c0_147, %c0_148] : memref<4x8x8xf32, #tpu.memory_space<vmem>>, vector<1x8x8xf32>
      %190 = vector.shape_cast %189 : vector<1x8x8xf32> to vector<8x8xf32>
      %191 = vector.broadcast %188 : vector<8x1xf32> to vector<8x8xf32>
      %192 = arith.mulf %190, %191 : vector<8x8xf32>
      %c0_149 = arith.constant 0 : index
      %c0_150 = arith.constant 0 : index
      %c16 = arith.constant 16 : index
      %193 = vector.load %arg6[%c0_149, %c0_150, %c16] : memref<1x8x32xf32, #tpu.memory_space<vmem>>, vector<1x8x8xf32>
      %194 = vector.shape_cast %193 : vector<1x8x8xf32> to vector<8x8xf32>
      %195 = vector.shape_cast %192 : vector<8x8xf32> to vector<1x8x8xf32>
      tpu.vector_store %arg6[%c0_149, %c0_150, %c16], %195 {strides = array<i32>} : memref<1x8x32xf32, #tpu.memory_space<vmem>>, vector<1x8x8xf32>,
      %c3_151 = arith.constant 3 : index
      %c0_152 = arith.constant 0 : index
      %c0_153 = arith.constant 0 : index
      %196 = vector.load %arg8[%c3_151, %c0_152, %c0_153] : memref<4x8x1xf32, #tpu.memory_space<vmem>>, vector<1x8x1xf32>
      %197 = vector.shape_cast %196 : vector<1x8x1xf32> to vector<8x1xf32>
      %198 = tpu.reciprocal %197 {approx = true} : vector<8x1xf32> -> vector<8x1xf32>
      %c3_154 = arith.constant 3 : index
      %c0_155 = arith.constant 0 : index
      %c0_156 = arith.constant 0 : index
      %199 = vector.load %arg9[%c3_154, %c0_155, %c0_156] : memref<4x8x8xf32, #tpu.memory_space<vmem>>, vector<1x8x8xf32>
      %200 = vector.shape_cast %199 : vector<1x8x8xf32> to vector<8x8xf32>
      %201 = vector.broadcast %198 : vector<8x1xf32> to vector<8x8xf32>
      %202 = arith.mulf %200, %201 : vector<8x8xf32>
      %c0_157 = arith.constant 0 : index
      %c0_158 = arith.constant 0 : index
      %c24 = arith.constant 24 : index
      %203 = vector.load %arg6[%c0_157, %c0_158, %c24] : memref<1x8x32xf32, #tpu.memory_space<vmem>>, vector<1x8x8xf32>
      %204 = vector.shape_cast %203 : vector<1x8x8xf32> to vector<8x8xf32>
      %205 = vector.shape_cast %202 : vector<8x8xf32> to vector<1x8x8xf32>
      tpu.vector_store %arg6[%c0_157, %c0_158, %c24], %205 {strides = array<i32>} : memref<1x8x32xf32, #tpu.memory_space<vmem>>, vector<1x8x8xf32>,
    } else {
    }
    return
  }
  func.func @transform_0(%arg0: i32, %arg1: i32, %arg2: i32) -> (i32, i32, i32) {
    %c0_i32 = arith.constant 0 : i32
    %c0_i32_0 = arith.constant 0 : i32
    return %arg0, %arg1, %c0_i32 : i32, i32, i32
  }
  func.func @transform_1(%arg0: i32, %arg1: i32, %arg2: i32) -> (i32, i32, i32) {
    %c0_i32 = arith.constant 0 : i32
    %c0_i32_0 = arith.constant 0 : i32
    return %arg0, %c0_i32, %arg2 : i32, i32, i32
  }
  func.func @transform_2(%arg0: i32, %arg1: i32, %arg2: i32) -> (i32, i32, i32) {
    %c0_i32 = arith.constant 0 : i32
    %c0_i32_0 = arith.constant 0 : i32
    return %arg0, %arg2, %c0_i32 : i32, i32, i32
  }
  func.func @transform_3(%arg0: i32, %arg1: i32, %arg2: i32) -> (i32, i32, i32) {
    %c0_i32 = arith.constant 0 : i32
    %c0_i32_0 = arith.constant 0 : i32
    return %arg0, %arg1, %c0_i32 : i32, i32, i32
  }
}

</mosaic_0001>

<llo_original>
// kernel: tpu_custom_call.1
$region0: #{tpu_custom_call.1}
  #allocation0 [shape = 'u32[]', space=smem, size = 0x4, offset = 0x4, fixed_abs, tag = 'smem constant byte address 0x4 - core index']
  #allocation1 [shape = 'u32[72,128]{1,0:T(1,128)}', space=vmem, size = 0x9000, scoped, tag = 'internal scratch']
  #allocation2 [shape = 'f32[4,8,1]{2,1,0:T(8,128)}', space=vmem, size = 0x4000, scoped, tag = 'scratch operand']
  #allocation3 [shape = 'f32[4,8,1]{2,1,0:T(8,128)}', space=vmem, size = 0x4000, scoped, tag = 'scratch operand']
  #allocation4 [shape = 'f32[4,8,8]{2,1,0:T(8,128)}', space=vmem, size = 0x4000, scoped, tag = 'scratch operand']
  %s0 = inlined_call_operand.vmem [shape: f32[8,8,8], index: 0, kind: input, shape index: {}]
  %s1 = inlined_call_operand.vmem [shape: f32[8,8,16], index: 1, kind: input, shape index: {}]
  %s2 = inlined_call_operand.vmem [shape: f32[8,16,8], index: 2, kind: input, shape index: {}]
  %s3 = inlined_call_operand.hbm [shape: f32[2,8,32], index: 3, kind: output, shape index: {}]
  %s4 = sld [smem:[#allocation0]]
  $region53: #{tpu_custom_call.1} parent=0
    _
  %s6 = ssub.s32 1, %s4
  %s7 = scalar_select 0, %s6, %s4
  $region1: #{tpu_custom_call.1} parent=0
    #allocation5 [shape = 'u8[8192]{0}', space=vmem, size = 0x2000, scoped, tag = 'output window, operand 0']
    #allocation6 [shape = 's32[2]{0}', space=sflag, size = 0x8, scoped, tag = 'scoped memory for tpu_custom_call.1']
    %8 = vsyncpa [#allocation6], 0
    %s9 = scalar_lea.sflag [#allocation6], 1
    %10 = vsyncpa %s9, 0
    loop: start=0, step=1, limit=4
    $region2: #{tpu_custom_call.1} parent=1 // loop_pre_header
      _
    $region3: #{tpu_custom_call.1} parent=1 // loop_header
      %s12 = sphi 0, %s16
      %p13 = scmp.ge.s32.totalorder %s12, 4
      %s19 = sphi 0, %s38
      %s20 = sphi 0, %s34
      %s21 = sphi 0, %s30
      %s22 = sphi 0, %s19
      %s23 = sphi 0, %s20
      %s24 = sphi 0, %s21
      %s25 = sphi 0, %s22
      %s26 = sphi 0, %s23
      %s27 = sphi 0, %s24
      %s43 = sphi 0, %s45
      %s46 = sphi 0, %s43
      %s47 = sphi 0, %s46
      %s63 = sphi 0, %s47
      %s71 = sphi 0, %s73
      %s74 = sphi 0, %s71
      %s75 = sphi 0, %s74
      %s91 = sphi 0, %s75
      %s99 = sphi 0, %s101
      %s102 = sphi 0, %s99
      %s103 = sphi 0, %s102
      %s119 = sphi 0, %s103
      %s127 = sphi 0, %s129
      %s130 = sphi 0, %s127
      %s131 = sphi 0, %s130
      %s147 = sphi 0, %s131
    $region4: #{tpu_custom_call.1} parent=1 // loop_header_branch
      %15 = sbr.rel (%p13) target = $region8
    $region5: #{tpu_custom_call.1} parent=1 // loop_body
      %s17 = ssub.s32 %s12, 1
      %s18 = ssub.s32 %s12, 2
      %s28 = sadd.s32 1, %s21
      %p29 = scmp.ge.s32.totalorder %s28, 1
      %s30 = scalar_select %p29, 0, %s28
      %s31 = sadd.s32 1, %s20
      %s32 = scalar_select %p29, %s31, %s20
      %p33 = scmp.ge.s32.totalorder %s32, 1
      %s34 = scalar_select %p33, 0, %s32
      %s35 = sadd.s32 1, %s19
      %s36 = scalar_select %p33, %s35, %s19
      %p37 = scmp.ge.s32.totalorder %s36, 2
      %s38 = scalar_select %p37, 0, %s36
      %s39 = ssub.s32 %s19, %s38
      %s40 = ssub.s32 %s20, %s34
      %s41 = sor.u32 %s39, %s40
      %p42 = scmp.eq.s32.totalorder %s41, 0
      %s44 = sadd.s32 %s43, 1
      %s45 = scalar_select %p42, %s43, %s44
      %p48 = pneg %p42
      %p49 = scmp.eq.s32.totalorder %s12, 1
      %p50 = por %p48, %p49
      %p51 = scmp.ne.s32.totalorder %s43, %s46
      %p52 = scmp.eq.s32.totalorder %s12, 0
      %p53 = por %p51, %p52
      %p54 = scmp.ne.s32.totalorder %s43, %s46
      %p55 = scmp.eq.s32.totalorder %s17, 1
      %p56 = por %p54, %p55
      %p57 = scmp.ne.s32.totalorder %s46, %s47
      %p58 = scmp.eq.s32.totalorder %s17, 0
      %p59 = por %p57, %p58
      %p60 = scmp.ne.s32.totalorder %s46, %s47
      %p61 = scmp.eq.s32.totalorder %s18, 1
      %p62 = por %p60, %p61
      %p64 = scmp.ne.s32.totalorder %s47, %s63
      %p65 = scmp.eq.s32.totalorder %s18, 0
      %p66 = por %p64, %p65
      %s67 = ssub.s32 %s19, %s38
      %s68 = ssub.s32 %s21, %s30
      %s69 = sor.u32 %s67, %s68
      %p70 = scmp.eq.s32.totalorder %s69, 0
      %s72 = sadd.s32 %s71, 1
      %s73 = scalar_select %p70, %s71, %s72
      %p76 = pneg %p70
      %p77 = scmp.eq.s32.totalorder %s12, 1
      %p78 = por %p76, %p77
      %p79 = scmp.ne.s32.totalorder %s71, %s74
      %p80 = scmp.eq.s32.totalorder %s12, 0
      %p81 = por %p79, %p80
      %p82 = scmp.ne.s32.totalorder %s71, %s74
      %p83 = scmp.eq.s32.totalorder %s17, 1
      %p84 = por %p82, %p83
      %p85 = scmp.ne.s32.totalorder %s74, %s75
      %p86 = scmp.eq.s32.totalorder %s17, 0
      %p87 = por %p85, %p86
      %p88 = scmp.ne.s32.totalorder %s74, %s75
      %p89 = scmp.eq.s32.totalorder %s18, 1
      %p90 = por %p88, %p89
      %p92 = scmp.ne.s32.totalorder %s75, %s91
      %p93 = scmp.eq.s32.totalorder %s18, 0
      %p94 = por %p92, %p93
      %s95 = ssub.s32 %s19, %s38
      %s96 = ssub.s32 %s21, %s30
      %s97 = sor.u32 %s95, %s96
      %p98 = scmp.eq.s32.totalorder %s97, 0
      %s100 = sadd.s32 %s99, 1
      %s101 = scalar_select %p98, %s99, %s100
      %p104 = pneg %p98
      %p105 = scmp.eq.s32.totalorder %s12, 1
      %p106 = por %p104, %p105
      %p107 = scmp.ne.s32.totalorder %s99, %s102
      %p108 = scmp.eq.s32.totalorder %s12, 0
      %p109 = por %p107, %p108
      %p110 = scmp.ne.s32.totalorder %s99, %s102
      %p111 = scmp.eq.s32.totalorder %s17, 1
      %p112 = por %p110, %p111
      %p113 = scmp.ne.s32.totalorder %s102, %s103
      %p114 = scmp.eq.s32.totalorder %s17, 0
      %p115 = por %p113, %p114
      %p116 = scmp.ne.s32.totalorder %s102, %s103
      %p117 = scmp.eq.s32.totalorder %s18, 1
      %p118 = por %p116, %p117
      %p120 = scmp.ne.s32.totalorder %s103, %s119
      %p121 = scmp.eq.s32.totalorder %s18, 0
      %p122 = por %p120, %p121
      %s123 = ssub.s32 %s19, %s38
      %s124 = ssub.s32 %s20, %s34
      %s125 = sor.u32 %s123, %s124
      %p126 = scmp.eq.s32.totalorder %s125, 0
      %s128 = sadd.s32 %s127, 1
      %s129 = scalar_select %p126, %s127, %s128
      %p132 = pneg %p126
      %p133 = scmp.eq.s32.totalorder %s12, 1
      %p134 = por %p132, %p133
      %p135 = scmp.ne.s32.totalorder %s127, %s130
      %p136 = scmp.eq.s32.totalorder %s12, 0
      %p137 = por %p135, %p136
      %p138 = scmp.ne.s32.totalorder %s127, %s130
      %p139 = scmp.eq.s32.totalorder %s17, 1
      %p140 = por %p138, %p139
      %p141 = scmp.ne.s32.totalorder %s130, %s131
      %p142 = scmp.eq.s32.totalorder %s17, 0
      %p143 = por %p141, %p142
      %p144 = scmp.ne.s32.totalorder %s130, %s131
      %p145 = scmp.eq.s32.totalorder %s18, 1
      %p146 = por %p144, %p145
      %p148 = scmp.ne.s32.totalorder %s131, %s147
      %p149 = scmp.eq.s32.totalorder %s18, 0
      %p150 = por %p148, %p149
      %p151 = scmp.le.s32.totalorder 1, %s12
      %p152 = scmp.lt.s32.totalorder %s12, 3
      %p153 = pnand %p151, %p152
      %p154 = pneg %p153
      // Predicated region
      $region9: #{tpu_custom_call.1} parent=5 // pred_check
        _
      $region10: #{tpu_custom_call.1} parent=5 // pred_check_branch
        %156 = sbr.rel (%p153) target = $region12
      $region11: #{tpu_custom_call.1} parent=5 // pred_region
        %s157 = ssub.s32 %s12, 1
      $region12: #{tpu_custom_call.1} parent=5 // pred_fallthru
        _
      %p158 = scmp.lt.s32.totalorder %s12, 2
      // Predicated region
      $region13: #{tpu_custom_call.1} parent=5 // pred_check
        %p159 = pneg %p158
      $region14: #{tpu_custom_call.1} parent=5 // pred_check_branch
        %161 = sbr.rel (%p159) target = $region16
      $region15: #{tpu_custom_call.1} parent=5 // pred_region
        // Predicated region
        $region17: #{tpu_custom_call.1} parent=15 // pred_check
          %p162 = pneg %p53
        $region18: #{tpu_custom_call.1} parent=15 // pred_check_branch
          %164 = sbr.rel (%p162) target = $region20
        $region19: #{tpu_custom_call.1} parent=15 // pred_region
          %s165 = smul.u32 4, %s19
          %p166 = scmp.lt.s32.totalorder %s165, 7
          %s167 = scalar_select %p166, %s165, 7
          %p168 = scmp.lt.s32.totalorder %s20, 0
          %s169 = scalar_select %p168, %s20, 0
          %s170 = sadd.s32 %s169, %s167
          %s171 = smul.addr %s170, 8
          %s172 = scalar_lea.vmem %s0, %s171
          %s173 = smul.u32 4, %s19
        $region20: #{tpu_custom_call.1} parent=15 // pred_fallthru
          _
        // Predicated region
        $region21: #{tpu_custom_call.1} parent=15 // pred_check
          %p174 = pneg %p81
        $region22: #{tpu_custom_call.1} parent=15 // pred_check_branch
          %176 = sbr.rel (%p174) target = $region24
        $region23: #{tpu_custom_call.1} parent=15 // pred_region
          %s177 = smul.u32 4, %s19
          %p178 = scmp.lt.s32.totalorder %s177, 7
          %s179 = scalar_select %p178, %s177, 7
          %p180 = scmp.lt.s32.totalorder %s21, 0
          %s181 = scalar_select %p180, %s21, 0
          %s182 = sadd.s32 %s181, %s179
          %s183 = smul.addr %s182, 8
          %s184 = scalar_lea.vmem %s1, %s183
          %s185 = smul.u32 4, %s19
        $region24: #{tpu_custom_call.1} parent=15 // pred_fallthru
          _
        // Predicated region
        $region25: #{tpu_custom_call.1} parent=15 // pred_check
          %p186 = pneg %p109
        $region26: #{tpu_custom_call.1} parent=15 // pred_check_branch
          %188 = sbr.rel (%p186) target = $region28
        $region27: #{tpu_custom_call.1} parent=15 // pred_region
          %s189 = smul.u32 4, %s19
          %s190 = smul.u32 2, %s21
          %p191 = scmp.lt.s32.totalorder %s189, 7
          %s192 = scalar_select %p191, %s189, 7
          %p193 = scmp.lt.s32.totalorder %s190, 1
          %s194 = scalar_select %p193, %s190, 1
          %s195 = smul.addr %s192, 2
          %s196 = sadd.s32 %s194, %s195
          %s197 = smul.addr %s196, 8
          %s198 = scalar_lea.vmem %s2, %s197
          %s199 = smul.u32 4, %s19
          %s200 = smul.u32 2, %s21
        $region28: #{tpu_custom_call.1} parent=15 // pred_fallthru
          _
      $region16: #{tpu_custom_call.1} parent=5 // pred_fallthru
        _
      %p201 = scmp.le.s32.totalorder 1, %s12
      %p202 = scmp.lt.s32.totalorder %s12, 3
      %p203 = pnand %p201, %p202
      %p204 = pneg %p203
      // Predicated region
      $region29: #{tpu_custom_call.1} parent=5 // pred_check
        _
      $region30: #{tpu_custom_call.1} parent=5 // pred_check_branch
        %206 = sbr.rel (%p203) target = $region32
      $region31: #{tpu_custom_call.1} parent=5 // pred_region
        %s207 = ssub.s32 %s12, 1
        %s208 = smul.u32 4, %s22
        %p209 = scmp.lt.s32.totalorder %s208, 7
        %s210 = scalar_select %p209, %s208, 7
        %p211 = scmp.lt.s32.totalorder %s23, 0
        %s212 = scalar_select %p211, %s23, 0
        %s213 = sadd.s32 %s212, %s210
        %s214 = smul.addr %s213, 8
        %s215 = scalar_lea.vmem %s0, %s214
        %p216 = pneg %p59
        %p217 = pneg %p56
        %s218 = smul.u32 4, %s22
        %p219 = scmp.lt.s32.totalorder %s218, 7
        %s220 = scalar_select %p219, %s218, 7
        %p221 = scmp.lt.s32.totalorder %s24, 0
        %s222 = scalar_select %p221, %s24, 0
        %s223 = sadd.s32 %s222, %s220
        %s224 = smul.addr %s223, 8
        %s225 = scalar_lea.vmem %s1, %s224
        %p226 = pneg %p87
        %p227 = pneg %p84
        %s228 = smul.u32 4, %s22
        %s229 = smul.u32 2, %s24
        %p230 = scmp.lt.s32.totalorder %s228, 7
        %s231 = scalar_select %p230, %s228, 7
        %p232 = scmp.lt.s32.totalorder %s229, 1
        %s233 = scalar_select %p232, %s229, 1
        %s234 = smul.addr %s231, 2
        %s235 = sadd.s32 %s233, %s234
        %s236 = smul.addr %s235, 8
        %s237 = scalar_lea.vmem %s2, %s236
        %p238 = pneg %p115
        %p239 = pneg %p112
        %p240 = pneg %p143
        %p241 = pneg %p140
        %s242 = sand.u32 %s130, 1
        %s243 = scalar_lea.sflag [#allocation6], %s242
        %s244 = sand.u32 %s130, 1
        %s245 = smul.addr %s244, 8
        %s246 = scalar_lea.vmem [#allocation5], %s245
        %s247 = smul.u32 4, %s22
        %p248 = scmp.lt.s32.totalorder %s247, 7
        %s249 = scalar_select %p248, %s247, 7
        %p250 = scmp.lt.s32.totalorder %s23, 0
        %s251 = scalar_select %p250, %s23, 0
        %s252 = sadd.s32 %s251, %s249
        %s253 = smul.addr %s252, 8
        %s254 = scalar_lea.vmem %s0, %s253
        %s255 = smul.u32 4, %s22
        %s256 = smul.u32 4, %s22
        %p257 = scmp.lt.s32.totalorder %s256, 7
        %s258 = scalar_select %p257, %s256, 7
        %p259 = scmp.lt.s32.totalorder %s24, 0
        %s260 = scalar_select %p259, %s24, 0
        %s261 = sadd.s32 %s260, %s258
        %s262 = smul.addr %s261, 8
        %s263 = scalar_lea.vmem %s1, %s262
        %s264 = smul.u32 4, %s22
        %s265 = smul.u32 4, %s22
        %s266 = smul.u32 2, %s24
        %p267 = scmp.lt.s32.totalorder %s265, 7
        %s268 = scalar_select %p267, %s265, 7
        %p269 = scmp.lt.s32.totalorder %s266, 1
        %s270 = scalar_select %p269, %s266, 1
        %s271 = smul.addr %s268, 2
        %s272 = sadd.s32 %s270, %s271
        %s273 = smul.addr %s272, 8
        %s274 = scalar_lea.vmem %s2, %s273
        %s275 = smul.u32 4, %s22
        %s276 = smul.u32 2, %s24
        %p277 = scmp.eq.s32.totalorder %s24, 0
        // Predicated region
        $region33: #{tpu_custom_call.1} parent=31 // pred_check
          %p278 = pneg %p277
        $region34: #{tpu_custom_call.1} parent=31 // pred_check_branch
          %280 = sbr.rel (%p278) target = $region36
        $region35: #{tpu_custom_call.1} parent=31 // pred_region
          %vm281 = vcmask 7168
          %282 = vst.msk [vmem:[#allocation2] sm:$0xff] %vm281, -inf
          %283 = vst.msk [vmem:[#allocation2 + $0x8] sm:$0xff] %vm281, -inf
          %284 = vst.msk [vmem:[#allocation2 + $0x10] sm:$0xff] %vm281, -inf
          %285 = vst.msk [vmem:[#allocation2 + $0x18] sm:$0xff] %vm281, -inf
          %286 = vst.msk [vmem:[#allocation3] sm:$0xff] %vm281, 0.0
          %287 = vst.msk [vmem:[#allocation3 + $0x8] sm:$0xff] %vm281, 0.0
          %288 = vst.msk [vmem:[#allocation3 + $0x10] sm:$0xff] %vm281, 0.0
          %289 = vst.msk [vmem:[#allocation3 + $0x18] sm:$0xff] %vm281, 0.0
          %vm290 = vcmask 64512
          %291 = vst.msk [vmem:[#allocation4] sm:$0xff] %vm290, 0.0
          %292 = vst.msk [vmem:[#allocation4 + $0x8] sm:$0xff] %vm290, 0.0
          %293 = vst.msk [vmem:[#allocation4 + $0x10] sm:$0xff] %vm290, 0.0
          %294 = vst.msk [vmem:[#allocation4 + $0x18] sm:$0xff] %vm290, 0.0
        $region36: #{tpu_custom_call.1} parent=31 // pred_fallthru
          _
        %v295 = vld [vmem:[%s254] sm:$0xff]
        %v296 = vmul.f32 %v295, 0.35355338
        %v297 = vld [vmem:[%s263] sm:$0xff]
        %vm298 = vcmask 64512
        %v300 = vsel %vm298, %v296, 0
        %302 = vmatpush.msra.mxu0 0.0
        %303 = vmatpush.msra.mxu0 0.0
        %304 = vmatpush.msra.mxu0 0.0
        %305 = vmatpush.msra.mxu0 0.0
        %306 = vmatpush.msra.mxu0 0.0
        %307 = vmatpush.msra.mxu0 0.0
        %308 = vmatpush.msra.mxu0 0.0
        %309 = vmatpush.msra.mxu0 0.0
        %310 = vmatpush.msra.mxu0 0.0
        %311 = vmatpush.msra.mxu0 0.0
        %312 = vmatpush.msra.mxu0 0.0
        %313 = vmatpush.msra.mxu0 0.0
        %314 = vmatpush.msra.mxu0 0.0
        %315 = vmatpush.msra.mxu0 0.0
        %316 = vmatpush.msra.mxu0 0.0
        %317 = vmatpush.msra.mxu0 %v297
        %318 = vmatmul.f32.gmra.mxu0 %v300
        %v319 = vpop.f32.mrf.mxu0
        %v320 = vadd.f32 0.0, %v319
        %321 = vdwg.mxu0
        %v322 = vld [vmem:[#allocation2] sm:$0xff]
        %vm323 = vcmask 130048
        %v324 = vsel %vm323, %v320, -inf
        %325 = vmax.xlane.f32.xlu0 %v324
        %v326 = vpop.xlane.xlu0 %325
        %v327 = vmax.f32 %v322, %v326
        %v328 = vsub.f32 %v322, %v327
        %v329 = vmul.f32 %v328, 1.442695
        %v330 = vpow.pop %v329
        %332 = vset.pattern.permute.xlu0 0
        %333 = vperm.xlu0 %332, %v327
        %v334 = vpop.permute.xlu0 %333
        %v336 = vsub.f32 %v320, %v334
        %v337 = vmul.f32 %v336, 1.442695
        %v338 = vpow.pop %v337
        %v339 = vld [vmem:[#allocation3] sm:$0xff]
        %v340 = vmul.f32 %v330, %v339
        %v341 = vsel %vm323, %v338, 0.0
        %342 = vadd.xlane.f32.xlu0 %v341
        %v343 = vpop.xlane.xlu0 %342
        %v344 = vadd.f32 %v340, %v343
        %vm345 = vcmask 7168
        %346 = vst.msk [vmem:[#allocation3] sm:$0xff] %vm345, %v344
        %v347 = vld [vmem:[#allocation4] sm:$0xff]
        %349 = vset.pattern.permute.xlu0 0
        %350 = vperm.xlu0 %349, %v330
        %v351 = vpop.permute.xlu0 %350
        %v353 = vmul.f32 %v351, %v347
        %v354 = vld [vmem:[%s274] sm:$0xff]
        %v355 = vld [vmem:[%s274 + $0x8] sm:$0xff]
        %v357 = vsel %vm323, %v338, 0
        %359 = vmatpush.msra.mxu0 0.0
        %360 = vmatpush.msra.mxu0 0.0
        %361 = vmatpush.msra.mxu0 0.0
        %362 = vmatpush.msra.mxu0 0.0
        %363 = vmatpush.msra.mxu0 0.0
        %364 = vmatpush.msra.mxu0 0.0
        %365 = vmatpush.msra.mxu0 0.0
        %366 = vmatpush.msra.mxu0 0.0
        %367 = vmatpush.msra.mxu0 0.0
        %368 = vmatpush.msra.mxu0 0.0
        %369 = vmatpush.msra.mxu0 0.0
        %370 = vmatpush.msra.mxu0 0.0
        %371 = vmatpush.msra.mxu0 0.0
        %372 = vmatpush.msra.mxu0 0.0
        %373 = vmatpush.msra.mxu0 %v355
        %374 = vmatpush.msra.mxu0 %v354
        %375 = vmatmul.f32.gmra.mxu0 %v357
        %v376 = vpop.f32.mrf.mxu0
        %v377 = vadd.f32 0.0, %v376
        %378 = vdwg.mxu0
        %v379 = vadd.f32 %v353, %v377
        %380 = vst.msk [vmem:[#allocation4] sm:$0xff] %vm298, %v379
        %381 = vst.msk [vmem:[#allocation2] sm:$0xff] %vm345, %v327
        %s382 = scalar_lea.vmem %s254, 8
        %v383 = vld [vmem:[%s382] sm:$0xff]
        %v384 = vmul.f32 %v383, 0.35355338
        %s385 = scalar_lea.vmem %s263, 8
        %v386 = vld [vmem:[%s385] sm:$0xff]
        %v388 = vsel %vm298, %v384, 0
        %390 = vmatpush.msra.mxu0 0.0
        %391 = vmatpush.msra.mxu0 0.0
        %392 = vmatpush.msra.mxu0 0.0
        %393 = vmatpush.msra.mxu0 0.0
        %394 = vmatpush.msra.mxu0 0.0
        %395 = vmatpush.msra.mxu0 0.0
        %396 = vmatpush.msra.mxu0 0.0
        %397 = vmatpush.msra.mxu0 0.0
        %398 = vmatpush.msra.mxu0 0.0
        %399 = vmatpush.msra.mxu0 0.0
        %400 = vmatpush.msra.mxu0 0.0
        %401 = vmatpush.msra.mxu0 0.0
        %402 = vmatpush.msra.mxu0 0.0
        %403 = vmatpush.msra.mxu0 0.0
        %404 = vmatpush.msra.mxu0 0.0
        %405 = vmatpush.msra.mxu0 %v386
        %406 = vmatmul.f32.gmra.mxu0 %v388
        %v407 = vpop.f32.mrf.mxu0
        %v408 = vadd.f32 0.0, %v407
        %409 = vdwg.mxu0
        %s410 = scalar_lea.vmem [#allocation2], 8
        %v411 = vld [vmem:[%s410] sm:$0xff]
        %v412 = vsel %vm323, %v408, -inf
        %413 = vmax.xlane.f32.xlu0 %v412
        %v414 = vpop.xlane.xlu0 %413
        %v415 = vmax.f32 %v411, %v414
        %v416 = vsub.f32 %v411, %v415
        %v417 = vmul.f32 %v416, 1.442695
        %v418 = vpow.pop %v417
        %420 = vset.pattern.permute.xlu0 0
        %421 = vperm.xlu0 %420, %v415
        %v422 = vpop.permute.xlu0 %421
        %v424 = vsub.f32 %v408, %v422
        %v425 = vmul.f32 %v424, 1.442695
        %v426 = vpow.pop %v425
        %s427 = scalar_lea.vmem [#allocation3], 8
        %v428 = vld [vmem:[%s427] sm:$0xff]
        %v429 = vmul.f32 %v418, %v428
        %v430 = vsel %vm323, %v426, 0.0
        %431 = vadd.xlane.f32.xlu0 %v430
        %v432 = vpop.xlane.xlu0 %431
        %v433 = vadd.f32 %v429, %v432
        %434 = vst.msk [vmem:[%s427] sm:$0xff] %vm345, %v433
        %s435 = scalar_lea.vmem [#allocation4], 8
        %v436 = vld [vmem:[%s435] sm:$0xff]
        %438 = vset.pattern.permute.xlu0 0
        %439 = vperm.xlu0 %438, %v418
        %v440 = vpop.permute.xlu0 %439
        %v442 = vmul.f32 %v440, %v436
        %s443 = scalar_lea.vmem %s274, 16
        %v444 = vld [vmem:[%s443] sm:$0xff]
        %v445 = vld [vmem:[%s443 + $0x8] sm:$0xff]
        %v447 = vsel %vm323, %v426, 0
        %449 = vmatpush.msra.mxu0 0.0
        %450 = vmatpush.msra.mxu0 0.0
        %451 = vmatpush.msra.mxu0 0.0
        %452 = vmatpush.msra.mxu0 0.0
        %453 = vmatpush.msra.mxu0 0.0
        %454 = vmatpush.msra.mxu0 0.0
        %455 = vmatpush.msra.mxu0 0.0
        %456 = vmatpush.msra.mxu0 0.0
        %457 = vmatpush.msra.mxu0 0.0
        %458 = vmatpush.msra.mxu0 0.0
        %459 = vmatpush.msra.mxu0 0.0
        %460 = vmatpush.msra.mxu0 0.0
        %461 = vmatpush.msra.mxu0 0.0
        %462 = vmatpush.msra.mxu0 0.0
        %463 = vmatpush.msra.mxu0 %v445
        %464 = vmatpush.msra.mxu0 %v444
        %465 = vmatmul.f32.gmra.mxu0 %v447
        %v466 = vpop.f32.mrf.mxu0
        %v467 = vadd.f32 0.0, %v466
        %468 = vdwg.mxu0
        %v469 = vadd.f32 %v442, %v467
        %470 = vst.msk [vmem:[%s435] sm:$0xff] %vm298, %v469
        %471 = vst.msk [vmem:[%s410] sm:$0xff] %vm345, %v415
        %s472 = scalar_lea.vmem %s254, 16
        %v473 = vld [vmem:[%s472] sm:$0xff]
        %v474 = vmul.f32 %v473, 0.35355338
        %s475 = scalar_lea.vmem %s263, 16
        %v476 = vld [vmem:[%s475] sm:$0xff]
        %v478 = vsel %vm298, %v474, 0
        %480 = vmatpush.msra.mxu0 0.0
        %481 = vmatpush.msra.mxu0 0.0
        %482 = vmatpush.msra.mxu0 0.0
        %483 = vmatpush.msra.mxu0 0.0
        %484 = vmatpush.msra.mxu0 0.0
        %485 = vmatpush.msra.mxu0 0.0
        %486 = vmatpush.msra.mxu0 0.0
        %487 = vmatpush.msra.mxu0 0.0
        %488 = vmatpush.msra.mxu0 0.0
        %489 = vmatpush.msra.mxu0 0.0
        %490 = vmatpush.msra.mxu0 0.0
        %491 = vmatpush.msra.mxu0 0.0
        %492 = vmatpush.msra.mxu0 0.0
        %493 = vmatpush.msra.mxu0 0.0
        %494 = vmatpush.msra.mxu0 0.0
        %495 = vmatpush.msra.mxu0 %v476
        %496 = vmatmul.f32.gmra.mxu0 %v478
        %v497 = vpop.f32.mrf.mxu0
        %v498 = vadd.f32 0.0, %v497
        %499 = vdwg.mxu0
        %s500 = scalar_lea.vmem [#allocation2], 16
        %v501 = vld [vmem:[%s500] sm:$0xff]
        %v502 = vsel %vm323, %v498, -inf
        %503 = vmax.xlane.f32.xlu0 %v502
        %v504 = vpop.xlane.xlu0 %503
        %v505 = vmax.f32 %v501, %v504
        %v506 = vsub.f32 %v501, %v505
        %v507 = vmul.f32 %v506, 1.442695
        %v508 = vpow.pop %v507
        %510 = vset.pattern.permute.xlu0 0
        %511 = vperm.xlu0 %510, %v505
        %v512 = vpop.permute.xlu0 %511
        %v514 = vsub.f32 %v498, %v512
        %v515 = vmul.f32 %v514, 1.442695
        %v516 = vpow.pop %v515
        %s517 = scalar_lea.vmem [#allocation3], 16
        %v518 = vld [vmem:[%s517] sm:$0xff]
        %v519 = vmul.f32 %v508, %v518
        %v520 = vsel %vm323, %v516, 0.0
        %521 = vadd.xlane.f32.xlu0 %v520
        %v522 = vpop.xlane.xlu0 %521
        %v523 = vadd.f32 %v519, %v522
        %524 = vst.msk [vmem:[%s517] sm:$0xff] %vm345, %v523
        %s525 = scalar_lea.vmem [#allocation4], 16
        %v526 = vld [vmem:[%s525] sm:$0xff]
        %528 = vset.pattern.permute.xlu0 0
        %529 = vperm.xlu0 %528, %v508
        %v530 = vpop.permute.xlu0 %529
        %v532 = vmul.f32 %v530, %v526
        %s533 = scalar_lea.vmem %s274, 32
        %v534 = vld [vmem:[%s533] sm:$0xff]
        %v535 = vld [vmem:[%s533 + $0x8] sm:$0xff]
        %v537 = vsel %vm323, %v516, 0
        %539 = vmatpush.msra.mxu0 0.0
        %540 = vmatpush.msra.mxu0 0.0
        %541 = vmatpush.msra.mxu0 0.0
        %542 = vmatpush.msra.mxu0 0.0
        %543 = vmatpush.msra.mxu0 0.0
        %544 = vmatpush.msra.mxu0 0.0
        %545 = vmatpush.msra.mxu0 0.0
        %546 = vmatpush.msra.mxu0 0.0
        %547 = vmatpush.msra.mxu0 0.0
        %548 = vmatpush.msra.mxu0 0.0
        %549 = vmatpush.msra.mxu0 0.0
        %550 = vmatpush.msra.mxu0 0.0
        %551 = vmatpush.msra.mxu0 0.0
        %552 = vmatpush.msra.mxu0 0.0
        %553 = vmatpush.msra.mxu0 %v535
        %554 = vmatpush.msra.mxu0 %v534
        %555 = vmatmul.f32.gmra.mxu0 %v537
        %v556 = vpop.f32.mrf.mxu0
        %v557 = vadd.f32 0.0, %v556
        %558 = vdwg.mxu0
        %v559 = vadd.f32 %v532, %v557
        %560 = vst.msk [vmem:[%s525] sm:$0xff] %vm298, %v559
        %561 = vst.msk [vmem:[%s500] sm:$0xff] %vm345, %v505
        %s562 = scalar_lea.vmem %s254, 24
        %v563 = vld [vmem:[%s562] sm:$0xff]
        %v564 = vmul.f32 %v563, 0.35355338
        %s565 = scalar_lea.vmem %s263, 24
        %v566 = vld [vmem:[%s565] sm:$0xff]
        %v568 = vsel %vm298, %v564, 0
        %570 = vmatpush.msra.mxu0 0.0
        %571 = vmatpush.msra.mxu0 0.0
        %572 = vmatpush.msra.mxu0 0.0
        %573 = vmatpush.msra.mxu0 0.0
        %574 = vmatpush.msra.mxu0 0.0
        %575 = vmatpush.msra.mxu0 0.0
        %576 = vmatpush.msra.mxu0 0.0
        %577 = vmatpush.msra.mxu0 0.0
        %578 = vmatpush.msra.mxu0 0.0
        %579 = vmatpush.msra.mxu0 0.0
        %580 = vmatpush.msra.mxu0 0.0
        %581 = vmatpush.msra.mxu0 0.0
        %582 = vmatpush.msra.mxu0 0.0
        %583 = vmatpush.msra.mxu0 0.0
        %584 = vmatpush.msra.mxu0 0.0
        %585 = vmatpush.msra.mxu0 %v566
        %586 = vmatmul.f32.gmra.mxu0 %v568
        %v587 = vpop.f32.mrf.mxu0
        %v588 = vadd.f32 0.0, %v587
        %589 = vdwg.mxu0
        %s590 = scalar_lea.vmem [#allocation2], 24
        %v591 = vld [vmem:[%s590] sm:$0xff]
        %v592 = vsel %vm323, %v588, -inf
        %593 = vmax.xlane.f32.xlu0 %v592
        %v594 = vpop.xlane.xlu0 %593
        %v595 = vmax.f32 %v591, %v594
        %v596 = vsub.f32 %v591, %v595
        %v597 = vmul.f32 %v596, 1.442695
        %v598 = vpow.pop %v597
        %600 = vset.pattern.permute.xlu0 0
        %601 = vperm.xlu0 %600, %v595
        %v602 = vpop.permute.xlu0 %601
        %v604 = vsub.f32 %v588, %v602
        %v605 = vmul.f32 %v604, 1.442695
        %v606 = vpow.pop %v605
        %s607 = scalar_lea.vmem [#allocation3], 24
        %v608 = vld [vmem:[%s607] sm:$0xff]
        %v609 = vmul.f32 %v598, %v608
        %v610 = vsel %vm323, %v606, 0.0
        %611 = vadd.xlane.f32.xlu0 %v610
        %v612 = vpop.xlane.xlu0 %611
        %v613 = vadd.f32 %v609, %v612
        %614 = vst.msk [vmem:[%s607] sm:$0xff] %vm345, %v613
        %s615 = scalar_lea.vmem [#allocation4], 24
        %v616 = vld [vmem:[%s615] sm:$0xff]
        %618 = vset.pattern.permute.xlu0 0
        %619 = vperm.xlu0 %618, %v598
        %v620 = vpop.permute.xlu0 %619
        %v622 = vmul.f32 %v620, %v616
        %s623 = scalar_lea.vmem %s274, 48
        %v624 = vld [vmem:[%s623] sm:$0xff]
        %v625 = vld [vmem:[%s623 + $0x8] sm:$0xff]
        %v627 = vsel %vm323, %v606, 0
        %629 = vmatpush.msra.mxu0 0.0
        %630 = vmatpush.msra.mxu0 0.0
        %631 = vmatpush.msra.mxu0 0.0
        %632 = vmatpush.msra.mxu0 0.0
        %633 = vmatpush.msra.mxu0 0.0
        %634 = vmatpush.msra.mxu0 0.0
        %635 = vmatpush.msra.mxu0 0.0
        %636 = vmatpush.msra.mxu0 0.0
        %637 = vmatpush.msra.mxu0 0.0
        %638 = vmatpush.msra.mxu0 0.0
        %639 = vmatpush.msra.mxu0 0.0
        %640 = vmatpush.msra.mxu0 0.0
        %641 = vmatpush.msra.mxu0 0.0
        %642 = vmatpush.msra.mxu0 0.0
        %643 = vmatpush.msra.mxu0 %v625
        %644 = vmatpush.msra.mxu0 %v624
        %645 = vmatmul.f32.gmra.mxu0 %v627
        %v646 = vpop.f32.mrf.mxu0
        %v647 = vadd.f32 0.0, %v646
        %648 = vdwg.mxu0
        %v649 = vadd.f32 %v622, %v647
        %650 = vst.msk [vmem:[%s615] sm:$0xff] %vm298, %v649
        %651 = vst.msk [vmem:[%s590] sm:$0xff] %vm345, %v595
        // Predicated region
        $region37: #{tpu_custom_call.1} parent=31 // pred_check
          %p652 = pneg %p277
        $region38: #{tpu_custom_call.1} parent=31 // pred_check_branch
          %654 = sbr.rel (%p652) target = $region40
        $region39: #{tpu_custom_call.1} parent=31 // pred_region
          %v655 = vld [vmem:[#allocation3] sm:$0xff]
          %v656 = vrcp.pop %v655
          %v657 = vld [vmem:[#allocation4] sm:$0xff]
          %659 = vset.pattern.permute.xlu0 0
          %660 = vperm.xlu0 %659, %v656
          %v661 = vpop.permute.xlu0 %660
          %v663 = vmul.f32 %v657, %v661
          %664 = vst.msk [vmem:[%s246] sm:$0xff] %vm298, %v663
          %v665 = vld [vmem:[%s427] sm:$0xff]
          %v666 = vrcp.pop %v665
          %v667 = vld [vmem:[%s435] sm:$0xff]
          %669 = vset.pattern.permute.xlu0 0
          %670 = vperm.xlu0 %669, %v666
          %v671 = vpop.permute.xlu0 %670
          %v673 = vmul.f32 %v667, %v671
          %675 = vrot.lane.b32.xlu0 %v673, 8
          %v676 = vpop.permute.xlu0 %675
          %vm678 = vcmask 130112
          %679 = vst.msk [vmem:[%s246] sm:$0xff] %vm678, %v676
          %v680 = vld [vmem:[%s517] sm:$0xff]
          %v681 = vrcp.pop %v680
          %v682 = vld [vmem:[%s525] sm:$0xff]
          %684 = vset.pattern.permute.xlu0 0
          %685 = vperm.xlu0 %684, %v681
          %v686 = vpop.permute.xlu0 %685
          %v688 = vmul.f32 %v682, %v686
          %690 = vrot.lane.b32.xlu0 %v688, 16
          %v691 = vpop.permute.xlu0 %690
          %vm693 = vcmask 195712
          %694 = vst.msk [vmem:[%s246] sm:$0xff] %vm693, %v691
          %v695 = vld [vmem:[%s607] sm:$0xff]
          %v696 = vrcp.pop %v695
          %v697 = vld [vmem:[%s615] sm:$0xff]
          %699 = vset.pattern.permute.xlu0 0
          %700 = vperm.xlu0 %699, %v696
          %v701 = vpop.permute.xlu0 %700
          %v703 = vmul.f32 %v697, %v701
          %705 = vrot.lane.b32.xlu0 %v703, 24
          %v706 = vpop.permute.xlu0 %705
          %vm708 = vcmask 261312
          %709 = vst.msk [vmem:[%s246] sm:$0xff] %vm708, %v706
        $region40: #{tpu_custom_call.1} parent=31 // pred_fallthru
          _
        %s710 = sand.u32 %s130, 1
        %s711 = scalar_lea.sflag [#allocation6], %s710
        %s712 = sand.u32 %s130, 1
        %s713 = smul.addr %s712, 8
        %s714 = scalar_lea.vmem [#allocation5], %s713
        // Predicated region
        $region41: #{tpu_custom_call.1} parent=31 // pred_check
          %p715 = pneg %p140
        $region42: #{tpu_custom_call.1} parent=31 // pred_check_branch
          %717 = sbr.rel (%p715) target = $region44
        $region43: #{tpu_custom_call.1} parent=31 // pred_region
          %719 = vsyncadd %s711, 0
          %s720 = sadd.s32 %s23, %s22
          %s721 = smul.addr %s720, 8
          %s722 = scalar_lea.hbm %s3, %s721
          %s724 = sshll.u32 %s714, 4
          %s725 = int_to_ptr.vmem [resolvable:$true] %s724
          %s726 = sshll.u32 %s722, 4
          %s727 = int_to_ptr.hbm [resolvable:$true] %s726
          %729 = dma.vmem_to_hbm [thread:$0]  %s725, 128, %s727, %s711
        $region44: #{tpu_custom_call.1} parent=31 // pred_fallthru
          _
      $region32: #{tpu_custom_call.1} parent=5 // pred_fallthru
        _
      %p730 = scmp.le.s32.totalorder 2, %s12
      // Predicated region
      $region45: #{tpu_custom_call.1} parent=5 // pred_check
        %p731 = pneg %p730
      $region46: #{tpu_custom_call.1} parent=5 // pred_check_branch
        %733 = sbr.rel (%p731) target = $region48
      $region47: #{tpu_custom_call.1} parent=5 // pred_region
        %s734 = ssub.s32 %s12, 2
        // Predicated region
        $region49: #{tpu_custom_call.1} parent=47 // pred_check
          %p735 = pneg %p146
        $region50: #{tpu_custom_call.1} parent=47 // pred_check_branch
          %737 = sbr.rel (%p735) target = $region52
        $region51: #{tpu_custom_call.1} parent=47 // pred_region
          %s738 = sand.u32 %s131, 1
          %s739 = scalar_lea.sflag [#allocation6], %s738
          %s740 = sand.u32 %s131, 1
          %s741 = smul.addr %s740, 8
          %s742 = scalar_lea.vmem [#allocation5], %s741
          %744 = dma.done %s739, 128
        $region52: #{tpu_custom_call.1} parent=47 // pred_fallthru
          _
      $region48: #{tpu_custom_call.1} parent=5 // pred_fallthru
        _
    $region6: #{tpu_custom_call.1} parent=1 // loop_footer
      %s16 = sadd.s32 1, %s12
    $region7: #{tpu_custom_call.1} parent=1 // loop_footer_branch
      %11 = sbr.rel target = $region3
    $region8: #{tpu_custom_call.1} parent=1 // loop_exit
      _
    %745 = vsyncpa [#allocation6], 1
    %s746 = scalar_lea.sflag [#allocation6], 1
    %747 = vsyncpa %s746, 1

</llo_original>
